<compile_context>
chip_gen: v6e
topology: v6e:2x2x1
jax: 0.10.0
libtpu: 0.0.40
codegen_flags: <defaults>
</compile_context>

<pallas_src>
import math

import jax
import jax.numpy as jnp
from jax import lax
from jax.experimental import pallas as pl
from jax.experimental.pallas import tpu as pltpu

_INV_SQRT2 = 1.0 / math.sqrt(2.0)


def _round_up(a: int, b: int) -> int:
    return (a + b - 1) // b * b


def _padded_feature_dim(S: int) -> int:
    # Lane-dense always; 256-aligned (when S > 128) so N/K tiles feed the
    # 256-wide MXUs of v6e/v7x at full width.
    return _round_up(S, 128) if S <= 128 else _round_up(S, 256)


def _sublane_multiple(dtype) -> int:
    itemsize = jnp.dtype(dtype).itemsize
    return {4: 8, 2: 16, 1: 32}.get(itemsize, 8)


def _select_tiles(B: int, Sp: int, dtype):
    # Batch tile: as big as possible up to 512, dtype-aware sublane rounding.
    tm = min(512, _round_up(B, _sublane_multiple(dtype)))
    # K tile: largest 128-multiple divisor of Sp (<= 2048) -> fewest grid
    # steps and fewest accumulator read-modify-writes (helps vst-limited v5e).
    tk = 128
    for cand in (2048, 1024, 512, 256):
        if Sp % cand == 0:
            tk = cand
            break
    # N tile: up to 512; but if the M grid axis collapses to one step, keep
    # >= 2 steps on the N axis so both v7x TensorCores get work.
    tn_cands = [c for c in (512, 256, 128) if Sp % c == 0]
    tn = tn_cands[0]
    if _round_up(B, tm) // tm == 1:
        for c in tn_cands:
            if Sp // c >= 2:
                tn = c
                break
    return tm, tn, tk


def _vmem_limit_bytes(tm: int, tn: int, tk: int, itemsize: int) -> int:
    # Double-buffered inputs/outputs + f32 accumulator, 1.5x headroom,
    # capped below v7x's 64 MiB physical VMEM.
    dbl = 2 * (
        tm * tk * itemsize      # x (matmul LHS)
        + tk * tn * itemsize    # W^T tile (K-major)
        + tm * tn * itemsize    # residual x tile
        + 8 * tn * 4            # bias row (sublane-padded)
        + tm * tn * itemsize    # output tile
    )
    acc = tm * tn * 4
    total = int(1.5 * (dbl + acc))
    return max(16 * 1024 * 1024, min(total, 48 * 1024 * 1024))


def _block_kernel(x_ref, w_ref, b_ref, xres_ref, o_ref, acc_ref):
    # x_ref   : [tm, tk]  activation tile (matmul LHS)
    # w_ref   : [tk, tn]  weight tile, K-major [in, out] (pre-transposed once)
    # b_ref   : [1,  tn]  bias tile
    # xres_ref: [tm, tn]  activation tile for the residual (constant across K)
    # o_ref   : [tm, tn]  output tile
    # acc_ref : [tm, tn]  f32 accumulator scratch (persists across the K axis)
    k = pl.program_id(2)

    partial = lax.dot_general(
        x_ref[...],
        w_ref[...],
        dimension_numbers=(((1,), (0,)), ((), ())),
        preferred_element_type=jnp.float32,
    )

    @pl.when(k == 0)
    def _():
        acc_ref[...] = partial

    @pl.when(k > 0)
    def _():
        acc_ref[...] += partial

    @pl.when(k == pl.num_programs(2) - 1)
    def _():
        h = acc_ref[...] + b_ref[...].astype(jnp.float32)
        # Exact (erf) GELU -- matches torch.nn.GELU() default.
        g = 0.5 * h * (1.0 + lax.erf(h * _INV_SQRT2))
        o_ref[...] = (xres_ref[...].astype(jnp.float32) + g).astype(o_ref.dtype)


def prepare_block_params(weight, bias):
    """One-time parameter prep, hoisted out of the per-call path.

    weight: [S, S] in PyTorch nn.Linear layout [out_features, in_features]
    bias:   [S]
    Returns (w_t, b_row): K-major weight [Sp, Sp] ([in, out]) and bias [1, Sp],
    zero-padded to the lane/MXU-aligned feature dim Sp.
    """
    S = weight.shape[0]
    Sp = _padded_feature_dim(S)
    w_t = jnp.transpose(weight)  # [in, out]  (no per-tile transpose in-kernel)
    if Sp != S:
        w_t = jnp.pad(w_t, ((0, Sp - S), (0, Sp - S)))
        bias = jnp.pad(bias, (0, Sp - S))
    return w_t, bias.reshape(1, Sp)


@jax.jit
def block_forward(x, w_t, b_row):
    """x: [..., S]; w_t: [Sp, Sp] prepared K-major weight; b_row: [1, Sp]."""
    orig_shape = x.shape
    S = orig_shape[-1]
    Sp = w_t.shape[0]
    x2 = x.reshape(-1, S)
    B = x2.shape[0]

    tm, tn, tk = _select_tiles(B, Sp, x.dtype)
    Bp = _round_up(B, tm)

    # Only x is padded per call (zeros are neutral for the contraction; padded
    # rows/cols are sliced off below).
    xp = x2
    if Bp != B or Sp != S:
        xp = jnp.pad(x2, ((0, Bp - B), (0, Sp - S)))

    grid = (Bp // tm, Sp // tn, Sp // tk)
    itemsize = jnp.dtype(x.dtype).itemsize

    cost = pl.CostEstimate(
        flops=2 * Bp * Sp * Sp,
        transcendentals=Bp * Sp,
        bytes_accessed=(2 * Bp * Sp + Sp * Sp + Sp + Bp * Sp) * itemsize,
    )

    out = pl.pallas_call(
        _block_kernel,
        out_shape=jax.ShapeDtypeStruct((Bp, Sp), x.dtype),
        grid_spec=pltpu.PrefetchScalarGridSpec(
            num_scalar_prefetch=0,
            grid=grid,
            in_specs=[
                pl.BlockSpec((tm, tk), lambda i, j, k: (i, k)),  # x (matmul LHS)
                pl.BlockSpec((tk, tn), lambda i, j, k: (k, j)),  # W^T (K-major)
                pl.BlockSpec((1, tn), lambda i, j, k: (0, j)),   # bias
                pl.BlockSpec((tm, tn), lambda i, j, k: (i, j)),  # x (residual)
            ],
            out_specs=pl.BlockSpec((tm, tn), lambda i, j, k: (i, j)),
            scratch_shapes=[pltpu.VMEM((tm, tn), jnp.float32)],
        ),
        compiler_params=pltpu.CompilerParams(
            dimension_semantics=("parallel", "parallel", "arbitrary"),
            vmem_limit_bytes=_vmem_limit_bytes(tm, tn, tk, itemsize),
        ),
        cost_estimate=cost,
    )(xp, w_t, b_row, xp)

    if Bp != B or Sp != S:
        out = out[:B, :S]
    return out.reshape(orig_shape)


def _reference(x, weight, bias):
    # Pure-JAX reference: x + GELU(x @ W.T + b), exact erf GELU.
    h = x @ weight.T + bias
    return x + 0.5 * h * (1.0 + lax.erf(h * _INV_SQRT2))


if __name__ == "__main__":
    key = jax.random.PRNGKey(0)

    # --- Small shape consistent with the module (batch of feature vectors) ---
    batch, size = 8, 32
    kx, kw, kb, key = jax.random.split(key, 4)
    bound = 1.0 / math.sqrt(size)
    x = jax.random.normal(kx, (batch, size), dtype=jnp.float32)
    weight = jax.random.uniform(
        kw, (size, size), minval=-bound, maxval=bound, dtype=jnp.float32
    )
    bias = jax.random.uniform(
        kb, (size,), minval=-bound, maxval=bound, dtype=jnp.float32
    )

    w_t, b_row = prepare_block_params(weight, bias)  # one-time setup
    out = block_forward(x, w_t, b_row)
    jax.block_until_ready(out)
    assert out.shape == x.shape
    assert jnp.allclose(out, _reference(x, weight, bias), atol=1e-5, rtol=1e-5), (
        "mismatch vs reference (small)"
    )

    # --- Second shape: exercises feature padding (600 -> 768) and multi-step
    #     K accumulation (tk=256 -> 3 K steps per output tile). ---
    batch2, size2 = 24, 600
    kx, kw, kb, key = jax.random.split(key, 4)
    bound2 = 1.0 / math.sqrt(size2)
    x2 = jax.random.normal(kx, (batch2, size2), dtype=jnp.float32)
    weight2 = jax.random.uniform(
        kw, (size2, size2), minval=-bound2, maxval=bound2, dtype=jnp.float32
    )
    bias2 = jax.random.uniform(
        kb, (size2,), minval=-bound2, maxval=bound2, dtype=jnp.float32
    )
    w_t2, b_row2 = prepare_block_params(weight2, bias2)
    out2 = block_forward(x2, w_t2, b_row2)
    jax.block_until_ready(out2)
    assert out2.shape == x2.shape
    assert jnp.allclose(out2, _reference(x2, weight2, bias2), atol=1e-4, rtol=1e-4), (
        "mismatch vs reference (padded / multi-K)"
    )

    print("KERNEL_OK")
</pallas_src>

<mosaic_0001>
module attributes {stable_mosaic.version = 11 : i64} {
  func.func @_block_kernel(%arg0: i32, %arg1: i32, %arg2: i32, %arg3: memref<8x128xf32, #tpu.memory_space<vmem>>, %arg4: memref<128x128xf32, #tpu.memory_space<vmem>>, %arg5: memref<1x128xf32, #tpu.memory_space<vmem>>, %arg6: memref<8x128xf32, #tpu.memory_space<vmem>>, %arg7: memref<8x128xf32, #tpu.memory_space<vmem>>, %arg8: memref<8x128xf32, #tpu.memory_space<vmem>>) attributes {dimension_semantics = [#tpu.dimension_semantics<parallel>, #tpu.dimension_semantics<parallel>, #tpu.dimension_semantics<arbitrary>], iteration_bounds = array<i64: 1, 1, 1>, scalar_prefetch = 0 : i64, scratch_operands = 1 : i64, tpu.core_type = #tpu.core_type<tc>, window_params = [{transform_indices = @transform_0, window_bounds = array<i64: 8, 128>}, {transform_indices = @transform_1, window_bounds = array<i64: 128, 128>}, {transform_indices = @transform_2, window_bounds = array<i64: 1, 128>}, {transform_indices = @transform_3, window_bounds = array<i64: 8, 128>}, {transform_indices = @transform_4, window_bounds = array<i64: 8, 128>}]} {
    %c0 = arith.constant 0 : index
    %c0_0 = arith.constant 0 : index
    %0 = vector.load %arg3[%c0, %c0_0] : memref<8x128xf32, #tpu.memory_space<vmem>>, vector<8x128xf32>
    %c0_1 = arith.constant 0 : index
    %c0_2 = arith.constant 0 : index
    %1 = vector.load %arg4[%c0_1, %c0_2] : memref<128x128xf32, #tpu.memory_space<vmem>>, vector<128x128xf32>
    %cst = arith.constant dense<0.000000e+00> : vector<8x128xf32>
    %2 = tpu.matmul %0, %1, %cst {dimension_numbers = #tpu.dot_dimension_numbers<[1], [0], [0], [1], [0, 0, 1, 1], [], []>} : vector<8x128xf32>, vector<128x128xf32>, vector<8x128xf32> -> vector<8x128xf32>
    %c0_i32 = arith.constant 0 : i32
    %3 = arith.cmpi eq, %arg2, %c0_i32 : i32
    %4 = arith.extui %3 : i1 to i32
    %c0_i32_3 = arith.constant 0 : i32
    %5 = arith.cmpi ne, %4, %c0_i32_3 : i32
    scf.if %5 {
      %c0_8 = arith.constant 0 : index
      %c0_9 = arith.constant 0 : index
      %12 = vector.load %arg8[%c0_8, %c0_9] : memref<8x128xf32, #tpu.memory_space<vmem>>, vector<8x128xf32>
      tpu.vector_store %arg8[%c0_8, %c0_9], %2 {strides = array<i32>} : memref<8x128xf32, #tpu.memory_space<vmem>>, vector<8x128xf32>,
    } else {
    }
    %c0_i32_4 = arith.constant 0 : i32
    %6 = arith.cmpi sgt, %arg2, %c0_i32_4 : i32
    %7 = arith.extui %6 : i1 to i32
    %c0_i32_5 = arith.constant 0 : i32
    %8 = arith.cmpi ne, %7, %c0_i32_5 : i32
    scf.if %8 {
      %c0_8 = arith.constant 0 : index
      %c0_9 = arith.constant 0 : index
      %12 = vector.load %arg8[%c0_8, %c0_9] : memref<8x128xf32, #tpu.memory_space<vmem>>, vector<8x128xf32>
      %13 = arith.addf %12, %2 : vector<8x128xf32>
      %c0_10 = arith.constant 0 : index
      %c0_11 = arith.constant 0 : index
      %14 = vector.load %arg8[%c0_10, %c0_11] : memref<8x128xf32, #tpu.memory_space<vmem>>, vector<8x128xf32>
      tpu.vector_store %arg8[%c0_10, %c0_11], %13 {strides = array<i32>} : memref<8x128xf32, #tpu.memory_space<vmem>>, vector<8x128xf32>,
    } else {
    }
    %c0_i32_6 = arith.constant 0 : i32
    %9 = arith.cmpi eq, %arg2, %c0_i32_6 : i32
    %10 = arith.extui %9 : i1 to i32
    %c0_i32_7 = arith.constant 0 : i32
    %11 = arith.cmpi ne, %10, %c0_i32_7 : i32
    scf.if %11 {
      %c0_8 = arith.constant 0 : index
      %c0_9 = arith.constant 0 : index
      %12 = vector.load %arg8[%c0_8, %c0_9] : memref<8x128xf32, #tpu.memory_space<vmem>>, vector<8x128xf32>
      %c0_10 = arith.constant 0 : index
      %c0_11 = arith.constant 0 : index
      %13 = vector.load %arg5[%c0_10, %c0_11] : memref<1x128xf32, #tpu.memory_space<vmem>>, vector<1x128xf32>
      %14 = vector.broadcast %13 : vector<1x128xf32> to vector<8x128xf32>
      %15 = arith.addf %12, %14 : vector<8x128xf32>
      %cst_12 = arith.constant 5.000000e-01 : f32
      %16 = vector.broadcast %cst_12 : f32 to vector<8x128xf32>
      %17 = arith.mulf %16, %15 : vector<8x128xf32>
      %cst_13 = arith.constant 0.707106769 : f32
      %18 = vector.broadcast %cst_13 : f32 to vector<8x128xf32>
      %19 = arith.mulf %15, %18 : vector<8x128xf32>
      %20 = math.erf %19 : vector<8x128xf32>
      %cst_14 = arith.constant 1.000000e+00 : f32
      %21 = vector.broadcast %cst_14 : f32 to vector<8x128xf32>
      %22 = arith.addf %21, %20 : vector<8x128xf32>
      %23 = arith.mulf %17, %22 : vector<8x128xf32>
      %c0_15 = arith.constant 0 : index
      %c0_16 = arith.constant 0 : index
      %24 = vector.load %arg6[%c0_15, %c0_16] : memref<8x128xf32, #tpu.memory_space<vmem>>, vector<8x128xf32>
      %25 = arith.addf %24, %23 : vector<8x128xf32>
      %c0_17 = arith.constant 0 : index
      %c0_18 = arith.constant 0 : index
      %26 = vector.load %arg7[%c0_17, %c0_18] : memref<8x128xf32, #tpu.memory_space<vmem>>, vector<8x128xf32>
      tpu.vector_store %arg7[%c0_17, %c0_18], %25 {strides = array<i32>} : memref<8x128xf32, #tpu.memory_space<vmem>>, vector<8x128xf32>,
    } else {
    }
    return
  }
  func.func @transform_0(%arg0: i32, %arg1: i32, %arg2: i32) -> (i32, i32) {
    %c0_i32 = arith.constant 0 : i32
    return %arg0, %arg2 : i32, i32
  }
  func.func @transform_1(%arg0: i32, %arg1: i32, %arg2: i32) -> (i32, i32) {
    %c0_i32 = arith.constant 0 : i32
    return %arg2, %arg1 : i32, i32
  }
  func.func @transform_2(%arg0: i32, %arg1: i32, %arg2: i32) -> (i32, i32) {
    %c0_i32 = arith.constant 0 : i32
    %c0_i32_0 = arith.constant 0 : i32
    return %c0_i32, %arg1 : i32, i32
  }
  func.func @transform_3(%arg0: i32, %arg1: i32, %arg2: i32) -> (i32, i32) {
    %c0_i32 = arith.constant 0 : i32
    return %arg0, %arg1 : i32, i32
  }
  func.func @transform_4(%arg0: i32, %arg1: i32, %arg2: i32) -> (i32, i32) {
    %c0_i32 = arith.constant 0 : i32
    return %arg0, %arg1 : i32, i32
  }
}

</mosaic_0001>

<llo_original>
// kernel: block_forward.1
$region0: #{block_forward.1}
  #allocation0 [shape = 'u32[]', space=smem, size = 0x4, offset = 0x4, fixed_abs, tag = 'smem constant byte address 0x4 - core index']
  #allocation1 [shape = 'u32[144,128]{1,0:T(1,128)}', space=vmem, size = 0x12000, scoped, tag = 'internal scratch']
  #allocation2 [shape = 'f32[8,128]{1,0:T(8,128)}', space=vmem, size = 0x1000, scoped, tag = 'scratch operand']
  %s0 = inlined_call_operand.vmem [shape: f32[8,128], index: 0, kind: input, shape index: {}, may-alias: {0,3}]
  %s1 = inlined_call_operand.hbm [shape: f32[128,128], index: 1, kind: input, shape index: {}]
  %s2 = inlined_call_operand.vmem [shape: f32[1,128], index: 2, kind: input, shape index: {}]
  %s3 = inlined_call_operand.vmem [shape: f32[8,128], index: 3, kind: input, shape index: {}, may-alias: {0,3}]
  %s4 = inlined_call_operand.hbm [shape: f32[8,128], index: 4, kind: output, shape index: {}]
  %s5 = sld [smem:[#allocation0]]
  $region42: #{block_forward.1} parent=0
    _
  %s7 = ssub.s32 1, %s5
  %s8 = scalar_select 0, %s7, %s5
  $region1: #{block_forward.1} parent=0
    #allocation3 [shape = 'u8[65536]{0}', space=vmem, size = 0x10000, scoped, tag = 'input window, operand 1, single buffered']
    #allocation4 [shape = 's32[1]{0}', space=sflag, size = 0x4, scoped, tag = 'scoped memory for block_forward.1']
    #allocation5 [shape = 's32[1]{0}', space=sflag, size = 0x4, scoped, tag = 'scoped memory for block_forward.1']
    #allocation6 [shape = 'u8[4096]{0}', space=vmem, size = 0x1000, scoped, tag = 'output window, operand 0, single buffered']
    %9 = vsyncpa [#allocation4], 0
    %10 = vsyncpa [#allocation5], 0
    // Predicated region
    $region2: #{block_forward.1} parent=1 // pred_check
      _
    $region3: #{block_forward.1} parent=1 // pred_check_branch
      %12 = sbr.rel (0) target = $region5
    $region4: #{block_forward.1} parent=1 // pred_region
      _
    $region5: #{block_forward.1} parent=1 // pred_fallthru
      _
    // Predicated region
    $region6: #{block_forward.1} parent=1 // pred_check
      _
    $region7: #{block_forward.1} parent=1 // pred_check_branch
      %14 = sbr.rel (0) target = $region9
    $region8: #{block_forward.1} parent=1 // pred_region
      %s16 = ssub.s32 2048, 2048
      %17 = vsyncadd [#allocation4], %s16
      %s18 = sshll.u32 [#allocation3], 4
      %s19 = int_to_ptr.vmem [resolvable:$true] %s18
      %24 = dma.hbm_to_vmem [thread:$0]  %s1, 2048, %s19, [#allocation4], 128, 128, 8
    $region9: #{block_forward.1} parent=1 // pred_fallthru
      _
    // Predicated region
    $region10: #{block_forward.1} parent=1 // pred_check
      _
    $region11: #{block_forward.1} parent=1 // pred_check_branch
      %26 = sbr.rel (0) target = $region13
    $region12: #{block_forward.1} parent=1 // pred_region
      _
    $region13: #{block_forward.1} parent=1 // pred_fallthru
      _
    // Predicated region
    $region14: #{block_forward.1} parent=1 // pred_check
      _
    $region15: #{block_forward.1} parent=1 // pred_check_branch
      %28 = sbr.rel (0) target = $region17
    $region16: #{block_forward.1} parent=1 // pred_region
      _
    $region17: #{block_forward.1} parent=1 // pred_fallthru
      _
    // Predicated region
    $region18: #{block_forward.1} parent=1 // pred_check
      _
    $region19: #{block_forward.1} parent=1 // pred_check_branch
      %30 = sbr.rel (0) target = $region21
    $region20: #{block_forward.1} parent=1 // pred_region
      %31 = dma.done [#allocation4], 2048
    $region21: #{block_forward.1} parent=1 // pred_fallthru
      _
    %v32 = vld [vmem:[%s0] sm:$0xff]
    %v33 = vld [vmem:[#allocation3] sm:$0xff]
    %v34 = vld [vmem:[#allocation3 + $0x8] sm:$0xff]
    %v35 = vld [vmem:[#allocation3 + $0x10] sm:$0xff]
    %v36 = vld [vmem:[#allocation3 + $0x18] sm:$0xff]
    %v37 = vld [vmem:[#allocation3 + $0x20] sm:$0xff]
    %v38 = vld [vmem:[#allocation3 + $0x28] sm:$0xff]
    %v39 = vld [vmem:[#allocation3 + $0x30] sm:$0xff]
    %v40 = vld [vmem:[#allocation3 + $0x38] sm:$0xff]
    %v41 = vld [vmem:[#allocation3 + $0x40] sm:$0xff]
    %v42 = vld [vmem:[#allocation3 + $0x48] sm:$0xff]
    %v43 = vld [vmem:[#allocation3 + $0x50] sm:$0xff]
    %v44 = vld [vmem:[#allocation3 + $0x58] sm:$0xff]
    %v45 = vld [vmem:[#allocation3 + $0x60] sm:$0xff]
    %v46 = vld [vmem:[#allocation3 + $0x68] sm:$0xff]
    %v47 = vld [vmem:[#allocation3 + $0x70] sm:$0xff]
    %v48 = vld [vmem:[#allocation3 + $0x78] sm:$0xff]
    %49 = vmatprep.subr.mxu0 0.0
    %50 = vmatpush1.msra.mxu0 %v48
    %51 = vmatprep.subr.mxu0 0.0
    %52 = vmatpush1.msra.mxu0 %v47
    %53 = vmatprep.subr.mxu0 0.0
    %54 = vmatpush1.msra.mxu0 %v46
    %55 = vmatprep.subr.mxu0 0.0
    %56 = vmatpush1.msra.mxu0 %v45
    %57 = vmatprep.subr.mxu0 0.0
    %58 = vmatpush1.msra.mxu0 %v44
    %59 = vmatprep.subr.mxu0 0.0
    %60 = vmatpush1.msra.mxu0 %v43
    %61 = vmatprep.subr.mxu0 0.0
    %62 = vmatpush1.msra.mxu0 %v42
    %63 = vmatprep.subr.mxu0 0.0
    %64 = vmatpush1.msra.mxu0 %v41
    %65 = vmatprep.subr.mxu0 0.0
    %66 = vmatpush1.msra.mxu0 %v40
    %67 = vmatprep.subr.mxu0 0.0
    %68 = vmatpush1.msra.mxu0 %v39
    %69 = vmatprep.subr.mxu0 0.0
    %70 = vmatpush1.msra.mxu0 %v38
    %71 = vmatprep.subr.mxu0 0.0
    %72 = vmatpush1.msra.mxu0 %v37
    %73 = vmatprep.subr.mxu0 0.0
    %74 = vmatpush1.msra.mxu0 %v36
    %75 = vmatprep.subr.mxu0 0.0
    %76 = vmatpush1.msra.mxu0 %v35
    %77 = vmatprep.subr.mxu0 0.0
    %78 = vmatpush1.msra.mxu0 %v34
    %79 = vmatprep.subr.mxu0 0.0
    %80 = vmatpush1.msra.mxu0 %v33
    %81 = vmatprep.subr.mxu0 0.0
    %82 = vmatpush2.msra.mxu0 0.0
    %83 = vmatprep.subr.mxu0 0.0
    %84 = vmatpush2.msra.mxu0 0.0
    %85 = vmatprep.subr.mxu0 0.0
    %86 = vmatpush2.msra.mxu0 0.0
    %87 = vmatprep.subr.mxu0 0.0
    %88 = vmatpush2.msra.mxu0 0.0
    %89 = vmatprep.subr.mxu0 0.0
    %90 = vmatpush2.msra.mxu0 0.0
    %91 = vmatprep.subr.mxu0 0.0
    %92 = vmatpush2.msra.mxu0 0.0
    %93 = vmatprep.subr.mxu0 0.0
    %94 = vmatpush2.msra.mxu0 0.0
    %95 = vmatprep.subr.mxu0 0.0
    %96 = vmatpush2.msra.mxu0 0.0
    %97 = vmatprep.subr.mxu0 0.0
    %98 = vmatpush2.msra.mxu0 0.0
    %99 = vmatprep.subr.mxu0 0.0
    %100 = vmatpush2.msra.mxu0 0.0
    %101 = vmatprep.subr.mxu0 0.0
    %102 = vmatpush2.msra.mxu0 0.0
    %103 = vmatprep.subr.mxu0 0.0
    %104 = vmatpush2.msra.mxu0 0.0
    %105 = vmatprep.subr.mxu0 0.0
    %106 = vmatpush2.msra.mxu0 0.0
    %107 = vmatprep.subr.mxu0 0.0
    %108 = vmatpush2.msra.mxu0 0.0
    %109 = vmatprep.subr.mxu0 0.0
    %110 = vmatpush2.msra.mxu0 0.0
    %111 = vmatprep.subr.mxu0 0.0
    %112 = vmatpush2.msra.mxu0 0.0
    %113 = vmatprep.mubr.f32.mxu0 0.0
    %114 = vmatmul.mubr.f32.gmra.mxu0 %v32
    %v115 = vpop.f32.mrf.mxu0
    %v116 = vadd.f32 0.0, %v115
    %v117 = vpop.f32.mrf.mxu0
    %118 = vdwg.mxu0
    %p119 = scmp.eq.s32.totalorder 0, 0
    // Predicated region
    $region22: #{block_forward.1} parent=1 // pred_check
      %p120 = pneg %p119
    $region23: #{block_forward.1} parent=1 // pred_check_branch
      %122 = sbr.rel (%p120) target = $region25
    $region24: #{block_forward.1} parent=1 // pred_region
      %123 = vst [vmem:[#allocation2] sm:$0xff] %v116
    $region25: #{block_forward.1} parent=1 // pred_fallthru
      _
    %p124 = scmp.gt.s32.totalorder 0, 0
    // Predicated region
    $region26: #{block_forward.1} parent=1 // pred_check
      %p125 = pneg %p124
    $region27: #{block_forward.1} parent=1 // pred_check_branch
      %127 = sbr.rel (%p125) target = $region29
    $region28: #{block_forward.1} parent=1 // pred_region
      %v128 = vld [vmem:[#allocation2] sm:$0xff]
      %v129 = vadd.f32 %v128, %v116
      %130 = vst [vmem:[#allocation2] sm:$0xff] %v129
    $region29: #{block_forward.1} parent=1 // pred_fallthru
      _
    // Predicated region
    $region30: #{block_forward.1} parent=1 // pred_check
      %p131 = pneg %p119
    $region31: #{block_forward.1} parent=1 // pred_check_branch
      %133 = sbr.rel (%p131) target = $region33
    $region32: #{block_forward.1} parent=1 // pred_region
      %v134 = vld [vmem:[#allocation2] sm:$0xff]
      %v135 = vld [vmem:[%s2] sm:$0x1]
      %v137 = vlaneseq
      %v138 = vshrl.u32 %v137, 7
      %v139 = vsub.s32 0, %v138
      %v140 = vrot.slane %v135, %v139
      %v142 = vadd.f32 %v134, %v140
      %v143 = vmul.f32 %v142, 0.5
      %v144 = vmul.f32 %v142, 0.70710677
      %v145 = verf.f32.pop %v144
      %v146 = vadd.f32 %v145, 1.0
      %v147 = vmul.f32 %v143, %v146
      %v148 = vld [vmem:[%s3] sm:$0xff]
      %v149 = vadd.f32 %v148, %v147
      %150 = vst [vmem:[#allocation6] sm:$0xff] %v149
    $region33: #{block_forward.1} parent=1 // pred_fallthru
      _
    // Predicated region
    $region34: #{block_forward.1} parent=1 // pred_check
      _
    $region35: #{block_forward.1} parent=1 // pred_check_branch
      %152 = sbr.rel (0) target = $region37
    $region36: #{block_forward.1} parent=1 // pred_region
      %s154 = ssub.s32 128, 128
      %155 = vsyncadd [#allocation5], %s154
      %s157 = sshll.u32 [#allocation6], 4
      %s158 = int_to_ptr.vmem [resolvable:$true] %s157
      %160 = dma.vmem_to_hbm [thread:$0]  %s158, 128, %s4, [#allocation5]
    $region37: #{block_forward.1} parent=1 // pred_fallthru
      _
    // Predicated region
    $region38: #{block_forward.1} parent=1 // pred_check
      _
    $region39: #{block_forward.1} parent=1 // pred_check_branch
      %162 = sbr.rel (0) target = $region41
    $region40: #{block_forward.1} parent=1 // pred_region
      %163 = dma.done [#allocation5], 128
    $region41: #{block_forward.1} parent=1 // pred_fallthru
      _
    %164 = vsyncpa [#allocation4], 1
    %165 = vsyncpa [#allocation5], 1

</llo_original>
